<compile_context>
chip_gen: v5e
topology: v5e:2x2
jax: 0.10.0
libtpu: 0.0.40
codegen_flags: <defaults>
</compile_context>

<pallas_src>
import functools

import jax
import jax.numpy as jnp
from jax import lax
from jax.experimental import pallas as pl
from jax.experimental.pallas import tpu as pltpu


# ------------------------------- kernel -------------------------------------


def basic_block_kernel(x_ref, w1_ref, b1_ref, w2_ref, b2_ref, o_ref, *, H, WC):
    """Fused BasicBlock for one image.

    x_ref  : (1, H, WC)   input tile in flattened-NHWC layout, WC = W*C lanes
    w*_ref : (3, WC, WC)  banded conv weights (one per ky; BN scale folded in)
    b*_ref : (1, WC)      folded BN bias, tiled over W
    o_ref  : (1, H, WC)   output tile
    """
    x = x_ref[0]                                   # (H, WC), reused as residual
    zero_row = jnp.zeros((1, WC), jnp.float32)

    def conv3x3_banded(a, w_ref):
        # Vertical (ky) halo: shift rows with zero boundary; horizontal (kx)
        # taps + zero padding live inside the banded weight matrices.
        up = jnp.concatenate([zero_row, a[:-1, :]], axis=0)   # input row y-1
        dn = jnp.concatenate([a[1:, :], zero_row], axis=0)    # input row y+1
        acc = jnp.dot(up, w_ref[0], preferred_element_type=jnp.float32)
        acc = acc + jnp.dot(a, w_ref[1], preferred_element_type=jnp.float32)
        acc = acc + jnp.dot(dn, w_ref[2], preferred_element_type=jnp.float32)
        return acc

    # conv1 + bn1 + relu (intermediate stays on-chip)
    h = jnp.maximum(conv3x3_banded(x, w1_ref) + b1_ref[...], 0.0)
    # conv2 + bn2 + residual + relu
    o_ref[0] = jnp.maximum(conv3x3_banded(h, w2_ref) + b2_ref[...] + x, 0.0)


# ------------------------------- wrappers ------------------------------------


def basic_block_forward_flat(x_flat, params):
    """x_flat: (N, H, W*C) flattened-NHWC activations (kernel-native layout)."""
    N, H, WC = x_flat.shape
    kernel = functools.partial(basic_block_kernel, H=H, WC=WC)
    return pl.pallas_call(
        kernel,
        grid=(N,),
        in_specs=[
            pl.BlockSpec((1, H, WC), lambda n: (n, 0, 0)),
            pl.BlockSpec((3, WC, WC), lambda n: (0, 0, 0)),
            pl.BlockSpec((1, WC), lambda n: (0, 0)),
            pl.BlockSpec((3, WC, WC), lambda n: (0, 0, 0)),
            pl.BlockSpec((1, WC), lambda n: (0, 0)),
        ],
        out_specs=pl.BlockSpec((1, H, WC), lambda n: (n, 0, 0)),
        out_shape=jax.ShapeDtypeStruct((N, H, WC), jnp.float32),
        compiler_params=pltpu.CompilerParams(
            dimension_semantics=("parallel",)),
    )(x_flat, params["w1"], params["b1"], params["w2"], params["b2"])


def basic_block_forward(x_nchw, params):
    """PyTorch-style NCHW interface.  The layout change is a one-time adapter
    outside the fused kernel; chained blocks should stay in the flattened-NHWC
    layout and call basic_block_forward_flat directly."""
    N, C, H, W = x_nchw.shape
    x_flat = jnp.transpose(x_nchw, (0, 2, 3, 1)).reshape(N, H, W * C)
    out = basic_block_forward_flat(x_flat, params)
    return jnp.transpose(out.reshape(N, H, W, C), (0, 3, 1, 2))


# ---------------------------- parameter setup --------------------------------


def make_params(key, inplanes, planes, W, eps=1e-5):
    assert inplanes == planes, "residual add without downsample needs inplanes == planes"
    ks = jax.random.split(key, 8)
    # conv weights in PyTorch OIHW layout.
    w1_oihw = jax.random.normal(ks[0], (planes, inplanes, 3, 3), jnp.float32) * 0.1
    w2_oihw = jax.random.normal(ks[1], (planes, planes, 3, 3), jnp.float32) * 0.1

    # Deterministically-initialized BN parameters / running stats, folded to
    # an inference-mode per-channel affine.
    g1 = 1.0 + 0.1 * jax.random.normal(ks[2], (planes,), jnp.float32)
    be1 = 0.1 * jax.random.normal(ks[3], (planes,), jnp.float32)
    m1 = 0.1 * jax.random.normal(ks[4], (planes,), jnp.float32)
    v1 = 1.0 + 0.1 * jax.random.uniform(ks[5], (planes,), jnp.float32)
    g2 = 1.0 + 0.1 * jax.random.normal(ks[6], (planes,), jnp.float32)
    be2 = 0.1 * jax.random.normal(ks[7], (planes,), jnp.float32)
    m2 = jnp.zeros((planes,), jnp.float32)
    v2 = jnp.ones((planes,), jnp.float32)

    def fold_bn(gamma, beta, mean, var):
        scale = gamma * lax.rsqrt(var + eps)
        return scale, beta - mean * scale

    s1, b1 = fold_bn(g1, be1, m1, v1)
    s2, b2 = fold_bn(g2, be2, m2, v2)

    def banded(w_oihw, scale):
        # OIHW -> (ky, kx, Cin, Cout), BN scale folded into Cout.
        w_eff = jnp.transpose(w_oihw, (2, 3, 1, 0)) * scale[None, None, None, :]
        # One (W*Cin, W*Cout) banded matrix per ky: block (xi, xo) holds the
        # (Cin, Cout) tap for kx = xi - xo + 1; out-of-range xi are simply
        # absent, which implements the horizontal zero padding for free.
        bands = []
        for ky in range(3):
            wb = sum(jnp.kron(jnp.eye(W, k=1 - kx, dtype=jnp.float32),
                              w_eff[ky, kx]) for kx in range(3))
            bands.append(wb)
        return jnp.stack(bands, axis=0)            # (3, W*Cin, W*Cout)

    params = {
        "w1": banded(w1_oihw, s1),
        "b1": jnp.tile(b1, W).reshape(1, W * planes),
        "w2": banded(w2_oihw, s2),
        "b2": jnp.tile(b2, W).reshape(1, W * planes),
    }
    raw = {"w1_oihw": w1_oihw, "w2_oihw": w2_oihw,
           "s1": s1, "b1": b1, "s2": s2, "b2": b2}
    return params, raw


# ------------------------------- reference -----------------------------------


def reference_forward(x_nchw, raw):
    def conv(x, w):
        return lax.conv_general_dilated(
            x, w, window_strides=(1, 1), padding=((1, 1), (1, 1)),
            dimension_numbers=("NCHW", "OIHW", "NCHW"))

    out = conv(x_nchw, raw["w1_oihw"])
    out = out * raw["s1"][None, :, None, None] + raw["b1"][None, :, None, None]
    out = jnp.maximum(out, 0.0)
    out = conv(out, raw["w2_oihw"])
    out = out * raw["s2"][None, :, None, None] + raw["b2"][None, :, None, None]
    out = out + x_nchw
    return jnp.maximum(out, 0.0)


# --------------------------------- main ---------------------------------------


if __name__ == "__main__":
    # inplanes = planes = 8, spatial 16x16: W*C = 128 -> fully lane-dense tiles.
    N, C, H, W = 2, 8, 16, 16
    key = jax.random.PRNGKey(0)
    kx_, kp = jax.random.split(key)
    x = jax.random.normal(kx_, (N, C, H, W), jnp.float32)
    params, raw = make_params(kp, inplanes=C, planes=C, W=W)

    out = jax.jit(basic_block_forward)(x, params)
    out = jax.block_until_ready(out)

    ref = reference_forward(x, raw)
    assert out.shape == ref.shape
    assert jnp.max(jnp.abs(out - ref)) < 1e-4

    # TODO(synk): training-mode BatchNorm (batch statistics + running-stat
    # updates) is not implemented; BN is folded as an inference-mode affine.
    print("KERNEL_OK")
</pallas_src>

<mosaic_0001>
module attributes {stable_mosaic.version = 11 : i64} {
  func.func @basic_block_kernel(%arg0: i32, %arg1: memref<1x16x128xf32, #tpu.memory_space<vmem>>, %arg2: memref<3x128x128xf32, #tpu.memory_space<vmem>>, %arg3: memref<1x128xf32, #tpu.memory_space<vmem>>, %arg4: memref<3x128x128xf32, #tpu.memory_space<vmem>>, %arg5: memref<1x128xf32, #tpu.memory_space<vmem>>, %arg6: memref<1x16x128xf32, #tpu.memory_space<vmem>>) attributes {dimension_semantics = [#tpu.dimension_semantics<parallel>], iteration_bounds = array<i64: 2>, scalar_prefetch = 0 : i64, scratch_operands = 0 : i64, tpu.core_type = #tpu.core_type<tc>, window_params = [{transform_indices = @transform_0, window_bounds = array<i64: 1, 16, 128>}, {pipeline_mode = #tpu.pipeline_mode<synchronous>, transform_indices = @transform_1, window_bounds = array<i64: 3, 128, 128>}, {pipeline_mode = #tpu.pipeline_mode<synchronous>, transform_indices = @transform_2, window_bounds = array<i64: 1, 128>}, {pipeline_mode = #tpu.pipeline_mode<synchronous>, transform_indices = @transform_3, window_bounds = array<i64: 3, 128, 128>}, {pipeline_mode = #tpu.pipeline_mode<synchronous>, transform_indices = @transform_4, window_bounds = array<i64: 1, 128>}, {transform_indices = @transform_5, window_bounds = array<i64: 1, 16, 128>}]} {
    %c0 = arith.constant 0 : index
    %c0_0 = arith.constant 0 : index
    %c0_1 = arith.constant 0 : index
    %0 = vector.load %arg1[%c0, %c0_0, %c0_1] : memref<1x16x128xf32, #tpu.memory_space<vmem>>, vector<1x16x128xf32>
    %1 = vector.shape_cast %0 : vector<1x16x128xf32> to vector<16x128xf32>
    %cst = arith.constant 0.000000e+00 : f32
    %2 = vector.broadcast %cst : f32 to vector<1x128xf32>
    %3 = vector.extract_strided_slice %1 {offsets = [0, 0], sizes = [15, 128], strides = [1, 1]} : vector<16x128xf32> to vector<15x128xf32>
    %4 = tpu.concatenate %2, %3 in 0 : vector<1x128xf32>, vector<15x128xf32> -> vector<16x128xf32>
    %5 = vector.extract_strided_slice %1 {offsets = [1, 0], sizes = [15, 128], strides = [1, 1]} : vector<16x128xf32> to vector<15x128xf32>
    %6 = tpu.concatenate %5, %2 in 0 : vector<15x128xf32>, vector<1x128xf32> -> vector<16x128xf32>
    %c0_2 = arith.constant 0 : index
    %c0_3 = arith.constant 0 : index
    %c0_4 = arith.constant 0 : index
    %7 = vector.load %arg2[%c0_2, %c0_3, %c0_4] : memref<3x128x128xf32, #tpu.memory_space<vmem>>, vector<1x128x128xf32>
    %8 = vector.shape_cast %7 : vector<1x128x128xf32> to vector<128x128xf32>
    %cst_5 = arith.constant dense<0.000000e+00> : vector<16x128xf32>
    %9 = tpu.matmul %4, %8, %cst_5 {dimension_numbers = #tpu.dot_dimension_numbers<[1], [0], [0], [1], [0, 0, 1, 1], [], []>} : vector<16x128xf32>, vector<128x128xf32>, vector<16x128xf32> -> vector<16x128xf32>
    %c1 = arith.constant 1 : index
    %c0_6 = arith.constant 0 : index
    %c0_7 = arith.constant 0 : index
    %10 = vector.load %arg2[%c1, %c0_6, %c0_7] : memref<3x128x128xf32, #tpu.memory_space<vmem>>, vector<1x128x128xf32>
    %11 = vector.shape_cast %10 : vector<1x128x128xf32> to vector<128x128xf32>
    %cst_8 = arith.constant dense<0.000000e+00> : vector<16x128xf32>
    %12 = tpu.matmul %1, %11, %cst_8 {dimension_numbers = #tpu.dot_dimension_numbers<[1], [0], [0], [1], [0, 0, 1, 1], [], []>} : vector<16x128xf32>, vector<128x128xf32>, vector<16x128xf32> -> vector<16x128xf32>
    %13 = arith.addf %9, %12 : vector<16x128xf32>
    %c2 = arith.constant 2 : index
    %c0_9 = arith.constant 0 : index
    %c0_10 = arith.constant 0 : index
    %14 = vector.load %arg2[%c2, %c0_9, %c0_10] : memref<3x128x128xf32, #tpu.memory_space<vmem>>, vector<1x128x128xf32>
    %15 = vector.shape_cast %14 : vector<1x128x128xf32> to vector<128x128xf32>
    %cst_11 = arith.constant dense<0.000000e+00> : vector<16x128xf32>
    %16 = tpu.matmul %6, %15, %cst_11 {dimension_numbers = #tpu.dot_dimension_numbers<[1], [0], [0], [1], [0, 0, 1, 1], [], []>} : vector<16x128xf32>, vector<128x128xf32>, vector<16x128xf32> -> vector<16x128xf32>
    %17 = arith.addf %13, %16 : vector<16x128xf32>
    %c0_12 = arith.constant 0 : index
    %c0_13 = arith.constant 0 : index
    %18 = vector.load %arg3[%c0_12, %c0_13] : memref<1x128xf32, #tpu.memory_space<vmem>>, vector<1x128xf32>
    %19 = vector.broadcast %18 : vector<1x128xf32> to vector<16x128xf32>
    %20 = arith.addf %17, %19 : vector<16x128xf32>
    %cst_14 = arith.constant 0.000000e+00 : f32
    %21 = vector.broadcast %cst_14 : f32 to vector<16x128xf32>
    %22 = arith.maximumf %20, %21 : vector<16x128xf32>
    %23 = vector.extract_strided_slice %22 {offsets = [0, 0], sizes = [15, 128], strides = [1, 1]} : vector<16x128xf32> to vector<15x128xf32>
    %24 = tpu.concatenate %2, %23 in 0 : vector<1x128xf32>, vector<15x128xf32> -> vector<16x128xf32>
    %25 = vector.extract_strided_slice %22 {offsets = [1, 0], sizes = [15, 128], strides = [1, 1]} : vector<16x128xf32> to vector<15x128xf32>
    %26 = tpu.concatenate %25, %2 in 0 : vector<15x128xf32>, vector<1x128xf32> -> vector<16x128xf32>
    %c0_15 = arith.constant 0 : index
    %c0_16 = arith.constant 0 : index
    %c0_17 = arith.constant 0 : index
    %27 = vector.load %arg4[%c0_15, %c0_16, %c0_17] : memref<3x128x128xf32, #tpu.memory_space<vmem>>, vector<1x128x128xf32>
    %28 = vector.shape_cast %27 : vector<1x128x128xf32> to vector<128x128xf32>
    %cst_18 = arith.constant dense<0.000000e+00> : vector<16x128xf32>
    %29 = tpu.matmul %24, %28, %cst_18 {dimension_numbers = #tpu.dot_dimension_numbers<[1], [0], [0], [1], [0, 0, 1, 1], [], []>} : vector<16x128xf32>, vector<128x128xf32>, vector<16x128xf32> -> vector<16x128xf32>
    %c1_19 = arith.constant 1 : index
    %c0_20 = arith.constant 0 : index
    %c0_21 = arith.constant 0 : index
    %30 = vector.load %arg4[%c1_19, %c0_20, %c0_21] : memref<3x128x128xf32, #tpu.memory_space<vmem>>, vector<1x128x128xf32>
    %31 = vector.shape_cast %30 : vector<1x128x128xf32> to vector<128x128xf32>
    %cst_22 = arith.constant dense<0.000000e+00> : vector<16x128xf32>
    %32 = tpu.matmul %22, %31, %cst_22 {dimension_numbers = #tpu.dot_dimension_numbers<[1], [0], [0], [1], [0, 0, 1, 1], [], []>} : vector<16x128xf32>, vector<128x128xf32>, vector<16x128xf32> -> vector<16x128xf32>
    %33 = arith.addf %29, %32 : vector<16x128xf32>
    %c2_23 = arith.constant 2 : index
    %c0_24 = arith.constant 0 : index
    %c0_25 = arith.constant 0 : index
    %34 = vector.load %arg4[%c2_23, %c0_24, %c0_25] : memref<3x128x128xf32, #tpu.memory_space<vmem>>, vector<1x128x128xf32>
    %35 = vector.shape_cast %34 : vector<1x128x128xf32> to vector<128x128xf32>
    %cst_26 = arith.constant dense<0.000000e+00> : vector<16x128xf32>
    %36 = tpu.matmul %26, %35, %cst_26 {dimension_numbers = #tpu.dot_dimension_numbers<[1], [0], [0], [1], [0, 0, 1, 1], [], []>} : vector<16x128xf32>, vector<128x128xf32>, vector<16x128xf32> -> vector<16x128xf32>
    %37 = arith.addf %33, %36 : vector<16x128xf32>
    %c0_27 = arith.constant 0 : index
    %c0_28 = arith.constant 0 : index
    %38 = vector.load %arg5[%c0_27, %c0_28] : memref<1x128xf32, #tpu.memory_space<vmem>>, vector<1x128xf32>
    %39 = vector.broadcast %38 : vector<1x128xf32> to vector<16x128xf32>
    %40 = arith.addf %37, %39 : vector<16x128xf32>
    %41 = arith.addf %40, %1 : vector<16x128xf32>
    %cst_29 = arith.constant 0.000000e+00 : f32
    %42 = vector.broadcast %cst_29 : f32 to vector<16x128xf32>
    %43 = arith.maximumf %41, %42 : vector<16x128xf32>
    %c0_30 = arith.constant 0 : index
    %c0_31 = arith.constant 0 : index
    %c0_32 = arith.constant 0 : index
    %44 = vector.load %arg6[%c0_30, %c0_31, %c0_32] : memref<1x16x128xf32, #tpu.memory_space<vmem>>, vector<1x16x128xf32>
    %45 = vector.shape_cast %44 : vector<1x16x128xf32> to vector<16x128xf32>
    %46 = vector.shape_cast %43 : vector<16x128xf32> to vector<1x16x128xf32>
    tpu.vector_store %arg6[%c0_30, %c0_31, %c0_32], %46 {strides = array<i32>} : memref<1x16x128xf32, #tpu.memory_space<vmem>>, vector<1x16x128xf32>,
    return
  }
  func.func @transform_0(%arg0: i32) -> (i32, i32, i32) {
    %c0_i32 = arith.constant 0 : i32
    %c0_i32_0 = arith.constant 0 : i32
    %c0_i32_1 = arith.constant 0 : i32
    return %arg0, %c0_i32, %c0_i32_0 : i32, i32, i32
  }
  func.func @transform_1(%arg0: i32) -> (i32, i32, i32) {
    %c0_i32 = arith.constant 0 : i32
    %c0_i32_0 = arith.constant 0 : i32
    %c0_i32_1 = arith.constant 0 : i32
    %c0_i32_2 = arith.constant 0 : i32
    return %c0_i32, %c0_i32_0, %c0_i32_1 : i32, i32, i32
  }
  func.func @transform_2(%arg0: i32) -> (i32, i32) {
    %c0_i32 = arith.constant 0 : i32
    %c0_i32_0 = arith.constant 0 : i32
    %c0_i32_1 = arith.constant 0 : i32
    return %c0_i32, %c0_i32_0 : i32, i32
  }
  func.func @transform_3(%arg0: i32) -> (i32, i32, i32) {
    %c0_i32 = arith.constant 0 : i32
    %c0_i32_0 = arith.constant 0 : i32
    %c0_i32_1 = arith.constant 0 : i32
    %c0_i32_2 = arith.constant 0 : i32
    return %c0_i32, %c0_i32_0, %c0_i32_1 : i32, i32, i32
  }
  func.func @transform_4(%arg0: i32) -> (i32, i32) {
    %c0_i32 = arith.constant 0 : i32
    %c0_i32_0 = arith.constant 0 : i32
    %c0_i32_1 = arith.constant 0 : i32
    return %c0_i32, %c0_i32_0 : i32, i32
  }
  func.func @transform_5(%arg0: i32) -> (i32, i32, i32) {
    %c0_i32 = arith.constant 0 : i32
    %c0_i32_0 = arith.constant 0 : i32
    %c0_i32_1 = arith.constant 0 : i32
    return %arg0, %c0_i32, %c0_i32_0 : i32, i32, i32
  }
}

</mosaic_0001>

<llo_original>
// kernel: basic_block_forward.1
$region0: #{basic_block_forward.1}
  #allocation0 [shape = 'u32[]', space=smem, size = 0x4, offset = 0x4, fixed_abs, tag = 'smem constant byte address 0x4 - core index']
  #allocation1 [shape = 'u32[72,128]{1,0:T(1,128)}', space=vmem, size = 0x9000, scoped, tag = 'internal scratch']
  %s0 = inlined_call_operand.vmem [shape: f32[2,16,128], index: 0, kind: input, shape index: {}]
  %s1 = inlined_call_operand.vmem [shape: f32[3,128,128], index: 1, kind: input, shape index: {}]
  %s2 = inlined_call_operand.vmem [shape: f32[1,128], index: 2, kind: input, shape index: {}]
  %s3 = inlined_call_operand.vmem [shape: f32[3,128,128], index: 3, kind: input, shape index: {}]
  %s4 = inlined_call_operand.vmem [shape: f32[1,128], index: 4, kind: input, shape index: {}]
  %s5 = inlined_call_operand.vmem [shape: f32[2,16,128], index: 5, kind: output, shape index: {}]
  %s6 = sld [smem:[#allocation0]]
  $region53: #{basic_block_forward.1} parent=0
    _
  %s8 = ssub.s32 1, %s6
  %s9 = scalar_select 0, %s8, %s6
  loop: start=0, step=1, limit=4
  $region2: #{basic_block_forward.1} parent=0 // loop_pre_header
    _
  $region3: #{basic_block_forward.1} parent=0 // loop_header
    %s11 = sphi 0, %s15
    %p12 = scmp.ge.s32.totalorder %s11, 4
    %s21 = sphi 0, %s23
    %s24 = sphi 0, %s21
    %s25 = sphi 0, %s24
    %s41 = sphi 0, %s25
    %s45 = sphi 0, %s45
    %s47 = sphi 0, %s45
    %s48 = sphi 0, %s47
    %s62 = sphi 0, %s48
    %s66 = sphi 0, %s66
    %s68 = sphi 0, %s66
    %s69 = sphi 0, %s68
    %s83 = sphi 0, %s69
    %s87 = sphi 0, %s87
    %s89 = sphi 0, %s87
    %s90 = sphi 0, %s89
    %s104 = sphi 0, %s90
    %s108 = sphi 0, %s108
    %s110 = sphi 0, %s108
    %s111 = sphi 0, %s110
    %s125 = sphi 0, %s111
    %s131 = sphi 0, %s133
    %s134 = sphi 0, %s131
    %s135 = sphi 0, %s134
    %s151 = sphi 0, %s135
  $region4: #{basic_block_forward.1} parent=0 // loop_header_branch
    %14 = sbr.rel (%p12) target = $region8
  $region5: #{basic_block_forward.1} parent=0 // loop_body
    %s16 = ssub.s32 %s11, 1
    %s17 = ssub.s32 %s11, 2
    %s18 = sadd.s32 %s11, 1
    %s19 = ssub.s32 %s11, %s18
    %p20 = scmp.eq.s32.totalorder %s19, 0
    %s22 = sadd.s32 %s21, 1
    %s23 = scalar_select %p20, %s21, %s22
    %p26 = pneg %p20
    %p27 = scmp.eq.s32.totalorder %s11, 1
    %p28 = por %p26, %p27
    %p29 = scmp.ne.s32.totalorder %s21, %s24
    %p30 = scmp.eq.s32.totalorder %s11, 0
    %p31 = por %p29, %p30
    %p32 = scmp.ne.s32.totalorder %s21, %s24
    %p33 = scmp.eq.s32.totalorder %s16, 1
    %p34 = por %p32, %p33
    %p35 = scmp.ne.s32.totalorder %s24, %s25
    %p36 = scmp.eq.s32.totalorder %s16, 0
    %p37 = por %p35, %p36
    %p38 = scmp.ne.s32.totalorder %s24, %s25
    %p39 = scmp.eq.s32.totalorder %s17, 1
    %p40 = por %p38, %p39
    %p42 = scmp.ne.s32.totalorder %s25, %s41
    %p43 = scmp.eq.s32.totalorder %s17, 0
    %p44 = por %p42, %p43
    %s46 = sadd.s32 %s45, 1
    %p49 = scmp.eq.s32.totalorder %s11, 1
    %p50 = scmp.ne.s32.totalorder %s45, %s47
    %p51 = scmp.eq.s32.totalorder %s11, 0
    %p52 = por %p50, %p51
    %p53 = scmp.ne.s32.totalorder %s45, %s47
    %p54 = scmp.eq.s32.totalorder %s16, 1
    %p55 = por %p53, %p54
    %p56 = scmp.ne.s32.totalorder %s47, %s48
    %p57 = scmp.eq.s32.totalorder %s16, 0
    %p58 = por %p56, %p57
    %p59 = scmp.ne.s32.totalorder %s47, %s48
    %p60 = scmp.eq.s32.totalorder %s17, 1
    %p61 = por %p59, %p60
    %p63 = scmp.ne.s32.totalorder %s48, %s62
    %p64 = scmp.eq.s32.totalorder %s17, 0
    %p65 = por %p63, %p64
    %s67 = sadd.s32 %s66, 1
    %p70 = scmp.eq.s32.totalorder %s11, 1
    %p71 = scmp.ne.s32.totalorder %s66, %s68
    %p72 = scmp.eq.s32.totalorder %s11, 0
    %p73 = por %p71, %p72
    %p74 = scmp.ne.s32.totalorder %s66, %s68
    %p75 = scmp.eq.s32.totalorder %s16, 1
    %p76 = por %p74, %p75
    %p77 = scmp.ne.s32.totalorder %s68, %s69
    %p78 = scmp.eq.s32.totalorder %s16, 0
    %p79 = por %p77, %p78
    %p80 = scmp.ne.s32.totalorder %s68, %s69
    %p81 = scmp.eq.s32.totalorder %s17, 1
    %p82 = por %p80, %p81
    %p84 = scmp.ne.s32.totalorder %s69, %s83
    %p85 = scmp.eq.s32.totalorder %s17, 0
    %p86 = por %p84, %p85
    %s88 = sadd.s32 %s87, 1
    %p91 = scmp.eq.s32.totalorder %s11, 1
    %p92 = scmp.ne.s32.totalorder %s87, %s89
    %p93 = scmp.eq.s32.totalorder %s11, 0
    %p94 = por %p92, %p93
    %p95 = scmp.ne.s32.totalorder %s87, %s89
    %p96 = scmp.eq.s32.totalorder %s16, 1
    %p97 = por %p95, %p96
    %p98 = scmp.ne.s32.totalorder %s89, %s90
    %p99 = scmp.eq.s32.totalorder %s16, 0
    %p100 = por %p98, %p99
    %p101 = scmp.ne.s32.totalorder %s89, %s90
    %p102 = scmp.eq.s32.totalorder %s17, 1
    %p103 = por %p101, %p102
    %p105 = scmp.ne.s32.totalorder %s90, %s104
    %p106 = scmp.eq.s32.totalorder %s17, 0
    %p107 = por %p105, %p106
    %s109 = sadd.s32 %s108, 1
    %p112 = scmp.eq.s32.totalorder %s11, 1
    %p113 = scmp.ne.s32.totalorder %s108, %s110
    %p114 = scmp.eq.s32.totalorder %s11, 0
    %p115 = por %p113, %p114
    %p116 = scmp.ne.s32.totalorder %s108, %s110
    %p117 = scmp.eq.s32.totalorder %s16, 1
    %p118 = por %p116, %p117
    %p119 = scmp.ne.s32.totalorder %s110, %s111
    %p120 = scmp.eq.s32.totalorder %s16, 0
    %p121 = por %p119, %p120
    %p122 = scmp.ne.s32.totalorder %s110, %s111
    %p123 = scmp.eq.s32.totalorder %s17, 1
    %p124 = por %p122, %p123
    %p126 = scmp.ne.s32.totalorder %s111, %s125
    %p127 = scmp.eq.s32.totalorder %s17, 0
    %p128 = por %p126, %p127
    %s129 = ssub.s32 %s11, %s18
    %p130 = scmp.eq.s32.totalorder %s129, 0
    %s132 = sadd.s32 %s131, 1
    %s133 = scalar_select %p130, %s131, %s132
    %p136 = pneg %p130
    %p137 = scmp.eq.s32.totalorder %s11, 1
    %p138 = por %p136, %p137
    %p139 = scmp.ne.s32.totalorder %s131, %s134
    %p140 = scmp.eq.s32.totalorder %s11, 0
    %p141 = por %p139, %p140
    %p142 = scmp.ne.s32.totalorder %s131, %s134
    %p143 = scmp.eq.s32.totalorder %s16, 1
    %p144 = por %p142, %p143
    %p145 = scmp.ne.s32.totalorder %s134, %s135
    %p146 = scmp.eq.s32.totalorder %s16, 0
    %p147 = por %p145, %p146
    %p148 = scmp.ne.s32.totalorder %s134, %s135
    %p149 = scmp.eq.s32.totalorder %s17, 1
    %p150 = por %p148, %p149
    %p152 = scmp.ne.s32.totalorder %s135, %s151
    %p153 = scmp.eq.s32.totalorder %s17, 0
    %p154 = por %p152, %p153
    %p155 = scmp.le.s32.totalorder 1, %s11
    %p156 = scmp.lt.s32.totalorder %s11, 3
    %p157 = pnand %p155, %p156
    %p158 = pneg %p157
    // Predicated region
    $region9: #{basic_block_forward.1} parent=5 // pred_check
      _
    $region10: #{basic_block_forward.1} parent=5 // pred_check_branch
      %160 = sbr.rel (%p157) target = $region12
    $region11: #{basic_block_forward.1} parent=5 // pred_region
      %s161 = ssub.s32 %s11, 1
      // Predicated region
      $region13: #{basic_block_forward.1} parent=11 // pred_check
        %p162 = pneg %p58
      $region14: #{basic_block_forward.1} parent=11 // pred_check_branch
        %164 = sbr.rel (%p162) target = $region16
      $region15: #{basic_block_forward.1} parent=11 // pred_region
        _
      $region16: #{basic_block_forward.1} parent=11 // pred_fallthru
        _
      // Predicated region
      $region17: #{basic_block_forward.1} parent=11 // pred_check
        %p165 = pneg %p79
      $region18: #{basic_block_forward.1} parent=11 // pred_check_branch
        %167 = sbr.rel (%p165) target = $region20
      $region19: #{basic_block_forward.1} parent=11 // pred_region
        _
      $region20: #{basic_block_forward.1} parent=11 // pred_fallthru
        _
      // Predicated region
      $region21: #{basic_block_forward.1} parent=11 // pred_check
        %p168 = pneg %p100
      $region22: #{basic_block_forward.1} parent=11 // pred_check_branch
        %170 = sbr.rel (%p168) target = $region24
      $region23: #{basic_block_forward.1} parent=11 // pred_region
        _
      $region24: #{basic_block_forward.1} parent=11 // pred_fallthru
        _
      // Predicated region
      $region25: #{basic_block_forward.1} parent=11 // pred_check
        %p171 = pneg %p121
      $region26: #{basic_block_forward.1} parent=11 // pred_check_branch
        %173 = sbr.rel (%p171) target = $region28
      $region27: #{basic_block_forward.1} parent=11 // pred_region
        _
      $region28: #{basic_block_forward.1} parent=11 // pred_fallthru
        _
    $region12: #{basic_block_forward.1} parent=5 // pred_fallthru
      _
    %p174 = scmp.lt.s32.totalorder %s11, 2
    // Predicated region
    $region29: #{basic_block_forward.1} parent=5 // pred_check
      %p175 = pneg %p174
    $region30: #{basic_block_forward.1} parent=5 // pred_check_branch
      %177 = sbr.rel (%p175) target = $region32
    $region31: #{basic_block_forward.1} parent=5 // pred_region
      // Predicated region
      $region33: #{basic_block_forward.1} parent=31 // pred_check
        %p178 = pneg %p31
      $region34: #{basic_block_forward.1} parent=31 // pred_check_branch
        %180 = sbr.rel (%p178) target = $region36
      $region35: #{basic_block_forward.1} parent=31 // pred_region
        %p181 = scmp.lt.s32.totalorder %s11, 1
        %s182 = scalar_select %p181, %s11, 1
        %s183 = smul.addr %s182, 2
        %s184 = smul.addr %s183, 8
        %s185 = scalar_lea.vmem %s0, %s184
      $region36: #{basic_block_forward.1} parent=31 // pred_fallthru
        _
    $region32: #{basic_block_forward.1} parent=5 // pred_fallthru
      _
    %p186 = scmp.le.s32.totalorder 1, %s11
    %p187 = scmp.lt.s32.totalorder %s11, 3
    %p188 = pnand %p186, %p187
    %p189 = pneg %p188
    // Predicated region
    $region37: #{basic_block_forward.1} parent=5 // pred_check
      _
    $region38: #{basic_block_forward.1} parent=5 // pred_check_branch
      %191 = sbr.rel (%p188) target = $region40
    $region39: #{basic_block_forward.1} parent=5 // pred_region
      %s192 = ssub.s32 %s11, 1
      %p193 = scmp.lt.s32.totalorder %s16, 1
      %s194 = scalar_select %p193, %s16, 1
      %s195 = smul.addr %s194, 2
      %s196 = smul.addr %s195, 8
      %s197 = scalar_lea.vmem %s0, %s196
      %p198 = pneg %p37
      %p199 = pneg %p34
      %p200 = pneg %p58
      %p201 = pneg %p55
      %p202 = pneg %p79
      %p203 = pneg %p76
      %p204 = pneg %p100
      %p205 = pneg %p97
      %p206 = pneg %p121
      %p207 = pneg %p118
      %p208 = pneg %p147
      %p209 = pneg %p144
      %p210 = scmp.lt.s32.totalorder %s16, 1
      %s211 = scalar_select %p210, %s16, 1
      %s212 = smul.addr %s211, 2
      %s213 = smul.addr %s212, 8
      %s214 = scalar_lea.vmem %s5, %s213
      %p215 = scmp.lt.s32.totalorder %s16, 1
      %s216 = scalar_select %p215, %s16, 1
      %s217 = smul.addr %s216, 2
      %s218 = smul.addr %s217, 8
      %s219 = scalar_lea.vmem %s0, %s218
      %p220 = scmp.lt.s32.totalorder %s16, 1
      %s221 = scalar_select %p220, %s16, 1
      %s222 = smul.addr %s221, 2
      %s223 = smul.addr %s222, 8
      %s224 = scalar_lea.vmem %s5, %s223
      %v225 = vld [vmem:[%s219] sm:$0xff]
      %v226 = vld [vmem:[%s219 + $0x8] sm:$0xff]
      %vm229 = vcmask 1040384
      %v230 = vrot.slane %v225, 7
      %v231 = vrot.slane %v226, 7
      %v232 = vsel %vm229, %v230, %v231
      %v235 = vsel %vm229, 0.0, %v230
      %vm236 = vcmask 1046528
      %v237 = vrot.slane %v225, 1
      %v238 = vrot.slane %v226, 1
      %v239 = vsel %vm236, %v237, %v238
      %v242 = vsel %vm236, %v238, 0.0
      %v243 = vld [vmem:[%s1] sm:$0xff]
      %v244 = vld [vmem:[%s1 + $0x8] sm:$0xff]
      %v245 = vld [vmem:[%s1 + $0x10] sm:$0xff]
      %v246 = vld [vmem:[%s1 + $0x18] sm:$0xff]
      %v247 = vld [vmem:[%s1 + $0x20] sm:$0xff]
      %v248 = vld [vmem:[%s1 + $0x28] sm:$0xff]
      %v249 = vld [vmem:[%s1 + $0x30] sm:$0xff]
      %v250 = vld [vmem:[%s1 + $0x38] sm:$0xff]
      %v251 = vld [vmem:[%s1 + $0x40] sm:$0xff]
      %v252 = vld [vmem:[%s1 + $0x48] sm:$0xff]
      %v253 = vld [vmem:[%s1 + $0x50] sm:$0xff]
      %v254 = vld [vmem:[%s1 + $0x58] sm:$0xff]
      %v255 = vld [vmem:[%s1 + $0x60] sm:$0xff]
      %v256 = vld [vmem:[%s1 + $0x68] sm:$0xff]
      %v257 = vld [vmem:[%s1 + $0x70] sm:$0xff]
      %v258 = vld [vmem:[%s1 + $0x78] sm:$0xff]
      %s259 = scalar_lea.vmem %s1, 128
      %v260 = vld [vmem:[%s259] sm:$0xff]
      %v261 = vld [vmem:[%s259 + $0x8] sm:$0xff]
      %v262 = vld [vmem:[%s259 + $0x10] sm:$0xff]
      %v263 = vld [vmem:[%s259 + $0x18] sm:$0xff]
      %v264 = vld [vmem:[%s259 + $0x20] sm:$0xff]
      %v265 = vld [vmem:[%s259 + $0x28] sm:$0xff]
      %v266 = vld [vmem:[%s259 + $0x30] sm:$0xff]
      %v267 = vld [vmem:[%s259 + $0x38] sm:$0xff]
      %v268 = vld [vmem:[%s259 + $0x40] sm:$0xff]
      %v269 = vld [vmem:[%s259 + $0x48] sm:$0xff]
      %v270 = vld [vmem:[%s259 + $0x50] sm:$0xff]
      %v271 = vld [vmem:[%s259 + $0x58] sm:$0xff]
      %v272 = vld [vmem:[%s259 + $0x60] sm:$0xff]
      %v273 = vld [vmem:[%s259 + $0x68] sm:$0xff]
      %v274 = vld [vmem:[%s259 + $0x70] sm:$0xff]
      %v275 = vld [vmem:[%s259 + $0x78] sm:$0xff]
      %276 = vmatpush.msra.mxu0 %v275
      %277 = vmatpush.msra.mxu0 %v274
      %278 = vmatpush.msra.mxu0 %v273
      %279 = vmatpush.msra.mxu0 %v272
      %280 = vmatpush.msra.mxu0 %v271
      %281 = vmatpush.msra.mxu0 %v270
      %282 = vmatpush.msra.mxu0 %v269
      %283 = vmatpush.msra.mxu0 %v268
      %284 = vmatpush.msra.mxu0 %v267
      %285 = vmatpush.msra.mxu0 %v266
      %286 = vmatpush.msra.mxu0 %v265
      %287 = vmatpush.msra.mxu0 %v264
      %288 = vmatpush.msra.mxu0 %v263
      %289 = vmatpush.msra.mxu0 %v262
      %290 = vmatpush.msra.mxu0 %v261
      %291 = vmatpush.msra.mxu0 %v260
      %292 = vmatmul.f32.gmra.mxu0 %v225
      %v293 = vpop.f32.mrf.mxu0
      %v294 = vadd.f32 0.0, %v293
      %295 = vmatmul.f32.gmra.mxu0 %v226
      %v296 = vpop.f32.mrf.mxu0
      %v297 = vadd.f32 0.0, %v296
      %298 = vdwg.mxu0
      %299 = vmatpush.msra.mxu0 %v258
      %300 = vmatpush.msra.mxu0 %v257
      %301 = vmatpush.msra.mxu0 %v256
      %302 = vmatpush.msra.mxu0 %v255
      %303 = vmatpush.msra.mxu0 %v254
      %304 = vmatpush.msra.mxu0 %v253
      %305 = vmatpush.msra.mxu0 %v252
      %306 = vmatpush.msra.mxu0 %v251
      %307 = vmatpush.msra.mxu0 %v250
      %308 = vmatpush.msra.mxu0 %v249
      %309 = vmatpush.msra.mxu0 %v248
      %310 = vmatpush.msra.mxu0 %v247
      %311 = vmatpush.msra.mxu0 %v246
      %312 = vmatpush.msra.mxu0 %v245
      %313 = vmatpush.msra.mxu0 %v244
      %314 = vmatpush.msra.mxu0 %v243
      %315 = vmatmul.f32.gmra.mxu0 %v235
      %v316 = vpop.f32.mrf.mxu0
      %v317 = vadd.f32 %v294, %v316
      %318 = vmatmul.f32.gmra.mxu0 %v232
      %v319 = vpop.f32.mrf.mxu0
      %v320 = vadd.f32 %v297, %v319
      %321 = vdwg.mxu0
      %s322 = scalar_lea.vmem %s1, 256
      %v323 = vld [vmem:[%s322] sm:$0xff]
      %v324 = vld [vmem:[%s322 + $0x8] sm:$0xff]
      %v325 = vld [vmem:[%s322 + $0x10] sm:$0xff]
      %v326 = vld [vmem:[%s322 + $0x18] sm:$0xff]
      %v327 = vld [vmem:[%s322 + $0x20] sm:$0xff]
      %v328 = vld [vmem:[%s322 + $0x28] sm:$0xff]
      %v329 = vld [vmem:[%s322 + $0x30] sm:$0xff]
      %v330 = vld [vmem:[%s322 + $0x38] sm:$0xff]
      %v331 = vld [vmem:[%s322 + $0x40] sm:$0xff]
      %v332 = vld [vmem:[%s322 + $0x48] sm:$0xff]
      %v333 = vld [vmem:[%s322 + $0x50] sm:$0xff]
      %v334 = vld [vmem:[%s322 + $0x58] sm:$0xff]
      %v335 = vld [vmem:[%s322 + $0x60] sm:$0xff]
      %v336 = vld [vmem:[%s322 + $0x68] sm:$0xff]
      %v337 = vld [vmem:[%s322 + $0x70] sm:$0xff]
      %v338 = vld [vmem:[%s322 + $0x78] sm:$0xff]
      %339 = vmatpush.msra.mxu0 %v338
      %340 = vmatpush.msra.mxu0 %v337
      %341 = vmatpush.msra.mxu0 %v336
      %342 = vmatpush.msra.mxu0 %v335
      %343 = vmatpush.msra.mxu0 %v334
      %344 = vmatpush.msra.mxu0 %v333
      %345 = vmatpush.msra.mxu0 %v332
      %346 = vmatpush.msra.mxu0 %v331
      %347 = vmatpush.msra.mxu0 %v330
      %348 = vmatpush.msra.mxu0 %v329
      %349 = vmatpush.msra.mxu0 %v328
      %350 = vmatpush.msra.mxu0 %v327
      %351 = vmatpush.msra.mxu0 %v326
      %352 = vmatpush.msra.mxu0 %v325
      %353 = vmatpush.msra.mxu0 %v324
      %354 = vmatpush.msra.mxu0 %v323
      %355 = vmatmul.f32.gmra.mxu0 %v239
      %v356 = vpop.f32.mrf.mxu0
      %v357 = vadd.f32 0.0, %v356
      %358 = vmatmul.f32.gmra.mxu0 %v242
      %v359 = vpop.f32.mrf.mxu0
      %v360 = vadd.f32 0.0, %v359
      %361 = vdwg.mxu0
      %v362 = vadd.f32 %v317, %v357
      %v363 = vadd.f32 %v320, %v360
      %v364 = vld [vmem:[%s2] sm:$0x1]
      %v366 = vperm.slane %v364, 0
      %v368 = vadd.f32 %v362, %v366
      %v369 = vadd.f32 %v363, %v366
      %v370 = vmax.f32 %v368, 0.0
      %v371 = vmax.f32 %v369, 0.0
      %v374 = vrot.slane %v370, 7
      %v375 = vrot.slane %v371, 7
      %v376 = vsel %vm229, %v374, %v375
      %v379 = vsel %vm229, 0.0, %v374
      %v380 = vrot.slane %v370, 1
      %v381 = vrot.slane %v371, 1
      %v382 = vsel %vm236, %v380, %v381
      %v385 = vsel %vm236, %v381, 0.0
      %v386 = vld [vmem:[%s3] sm:$0xff]
      %v387 = vld [vmem:[%s3 + $0x8] sm:$0xff]
      %v388 = vld [vmem:[%s3 + $0x10] sm:$0xff]
      %v389 = vld [vmem:[%s3 + $0x18] sm:$0xff]
      %v390 = vld [vmem:[%s3 + $0x20] sm:$0xff]
      %v391 = vld [vmem:[%s3 + $0x28] sm:$0xff]
      %v392 = vld [vmem:[%s3 + $0x30] sm:$0xff]
      %v393 = vld [vmem:[%s3 + $0x38] sm:$0xff]
      %v394 = vld [vmem:[%s3 + $0x40] sm:$0xff]
      %v395 = vld [vmem:[%s3 + $0x48] sm:$0xff]
      %v396 = vld [vmem:[%s3 + $0x50] sm:$0xff]
      %v397 = vld [vmem:[%s3 + $0x58] sm:$0xff]
      %v398 = vld [vmem:[%s3 + $0x60] sm:$0xff]
      %v399 = vld [vmem:[%s3 + $0x68] sm:$0xff]
      %v400 = vld [vmem:[%s3 + $0x70] sm:$0xff]
      %v401 = vld [vmem:[%s3 + $0x78] sm:$0xff]
      %s402 = scalar_lea.vmem %s3, 128
      %v403 = vld [vmem:[%s402] sm:$0xff]
      %v404 = vld [vmem:[%s402 + $0x8] sm:$0xff]
      %v405 = vld [vmem:[%s402 + $0x10] sm:$0xff]
      %v406 = vld [vmem:[%s402 + $0x18] sm:$0xff]
      %v407 = vld [vmem:[%s402 + $0x20] sm:$0xff]
      %v408 = vld [vmem:[%s402 + $0x28] sm:$0xff]
      %v409 = vld [vmem:[%s402 + $0x30] sm:$0xff]
      %v410 = vld [vmem:[%s402 + $0x38] sm:$0xff]
      %v411 = vld [vmem:[%s402 + $0x40] sm:$0xff]
      %v412 = vld [vmem:[%s402 + $0x48] sm:$0xff]
      %v413 = vld [vmem:[%s402 + $0x50] sm:$0xff]
      %v414 = vld [vmem:[%s402 + $0x58] sm:$0xff]
      %v415 = vld [vmem:[%s402 + $0x60] sm:$0xff]
      %v416 = vld [vmem:[%s402 + $0x68] sm:$0xff]
      %v417 = vld [vmem:[%s402 + $0x70] sm:$0xff]
      %v418 = vld [vmem:[%s402 + $0x78] sm:$0xff]
      %419 = vmatpush.msra.mxu0 %v418
      %420 = vmatpush.msra.mxu0 %v417
      %421 = vmatpush.msra.mxu0 %v416
      %422 = vmatpush.msra.mxu0 %v415
      %423 = vmatpush.msra.mxu0 %v414
      %424 = vmatpush.msra.mxu0 %v413
      %425 = vmatpush.msra.mxu0 %v412
      %426 = vmatpush.msra.mxu0 %v411
      %427 = vmatpush.msra.mxu0 %v410
      %428 = vmatpush.msra.mxu0 %v409
      %429 = vmatpush.msra.mxu0 %v408
      %430 = vmatpush.msra.mxu0 %v407
      %431 = vmatpush.msra.mxu0 %v406
      %432 = vmatpush.msra.mxu0 %v405
      %433 = vmatpush.msra.mxu0 %v404
      %434 = vmatpush.msra.mxu0 %v403
      %435 = vmatmul.f32.gmra.mxu0 %v370
      %v436 = vpop.f32.mrf.mxu0
      %v437 = vadd.f32 0.0, %v436
      %438 = vmatmul.f32.gmra.mxu0 %v371
      %v439 = vpop.f32.mrf.mxu0
      %v440 = vadd.f32 0.0, %v439
      %441 = vdwg.mxu0
      %442 = vmatpush.msra.mxu0 %v401
      %443 = vmatpush.msra.mxu0 %v400
      %444 = vmatpush.msra.mxu0 %v399
      %445 = vmatpush.msra.mxu0 %v398
      %446 = vmatpush.msra.mxu0 %v397
      %447 = vmatpush.msra.mxu0 %v396
      %448 = vmatpush.msra.mxu0 %v395
      %449 = vmatpush.msra.mxu0 %v394
      %450 = vmatpush.msra.mxu0 %v393
      %451 = vmatpush.msra.mxu0 %v392
      %452 = vmatpush.msra.mxu0 %v391
      %453 = vmatpush.msra.mxu0 %v390
      %454 = vmatpush.msra.mxu0 %v389
      %455 = vmatpush.msra.mxu0 %v388
      %456 = vmatpush.msra.mxu0 %v387
      %457 = vmatpush.msra.mxu0 %v386
      %458 = vmatmul.f32.gmra.mxu0 %v379
      %v459 = vpop.f32.mrf.mxu0
      %v460 = vadd.f32 %v437, %v459
      %461 = vmatmul.f32.gmra.mxu0 %v376
      %v462 = vpop.f32.mrf.mxu0
      %v463 = vadd.f32 %v440, %v462
      %464 = vdwg.mxu0
      %s465 = scalar_lea.vmem %s3, 256
      %v466 = vld [vmem:[%s465] sm:$0xff]
      %v467 = vld [vmem:[%s465 + $0x8] sm:$0xff]
      %v468 = vld [vmem:[%s465 + $0x10] sm:$0xff]
      %v469 = vld [vmem:[%s465 + $0x18] sm:$0xff]
      %v470 = vld [vmem:[%s465 + $0x20] sm:$0xff]
      %v471 = vld [vmem:[%s465 + $0x28] sm:$0xff]
      %v472 = vld [vmem:[%s465 + $0x30] sm:$0xff]
      %v473 = vld [vmem:[%s465 + $0x38] sm:$0xff]
      %v474 = vld [vmem:[%s465 + $0x40] sm:$0xff]
      %v475 = vld [vmem:[%s465 + $0x48] sm:$0xff]
      %v476 = vld [vmem:[%s465 + $0x50] sm:$0xff]
      %v477 = vld [vmem:[%s465 + $0x58] sm:$0xff]
      %v478 = vld [vmem:[%s465 + $0x60] sm:$0xff]
      %v479 = vld [vmem:[%s465 + $0x68] sm:$0xff]
      %v480 = vld [vmem:[%s465 + $0x70] sm:$0xff]
      %v481 = vld [vmem:[%s465 + $0x78] sm:$0xff]
      %482 = vmatpush.msra.mxu0 %v481
      %483 = vmatpush.msra.mxu0 %v480
      %484 = vmatpush.msra.mxu0 %v479
      %485 = vmatpush.msra.mxu0 %v478
      %486 = vmatpush.msra.mxu0 %v477
      %487 = vmatpush.msra.mxu0 %v476
      %488 = vmatpush.msra.mxu0 %v475
      %489 = vmatpush.msra.mxu0 %v474
      %490 = vmatpush.msra.mxu0 %v473
      %491 = vmatpush.msra.mxu0 %v472
      %492 = vmatpush.msra.mxu0 %v471
      %493 = vmatpush.msra.mxu0 %v470
      %494 = vmatpush.msra.mxu0 %v469
      %495 = vmatpush.msra.mxu0 %v468
      %496 = vmatpush.msra.mxu0 %v467
      %497 = vmatpush.msra.mxu0 %v466
      %498 = vmatmul.f32.gmra.mxu0 %v382
      %v499 = vpop.f32.mrf.mxu0
      %v500 = vadd.f32 0.0, %v499
      %501 = vmatmul.f32.gmra.mxu0 %v385
      %v502 = vpop.f32.mrf.mxu0
      %v503 = vadd.f32 0.0, %v502
      %504 = vdwg.mxu0
      %v505 = vadd.f32 %v460, %v500
      %v506 = vadd.f32 %v463, %v503
      %v507 = vld [vmem:[%s4] sm:$0x1]
      %v509 = vperm.slane %v507, 0
      %v511 = vadd.f32 %v505, %v509
      %v512 = vadd.f32 %v506, %v509
      %v513 = vadd.f32 %v511, %v225
      %v514 = vadd.f32 %v512, %v226
      %v515 = vmax.f32 %v513, 0.0
      %v516 = vmax.f32 %v514, 0.0
      %517 = vst [vmem:[%s224] sm:$0xff] %v515
      %518 = vst [vmem:[%s224 + $0x8] sm:$0xff] %v516
      %p519 = scmp.lt.s32.totalorder %s16, 1
      %s520 = scalar_select %p519, %s16, 1
      %s521 = smul.addr %s520, 2
      %s522 = smul.addr %s521, 8
      %s523 = scalar_lea.vmem %s5, %s522
      // Predicated region
      $region41: #{basic_block_forward.1} parent=39 // pred_check
        %p524 = pneg %p144
      $region42: #{basic_block_forward.1} parent=39 // pred_check_branch
        %526 = sbr.rel (%p524) target = $region44
      $region43: #{basic_block_forward.1} parent=39 // pred_region
        _
      $region44: #{basic_block_forward.1} parent=39 // pred_fallthru
        _
    $region40: #{basic_block_forward.1} parent=5 // pred_fallthru
      _
    %p527 = scmp.le.s32.totalorder 2, %s11
    // Predicated region
    $region45: #{basic_block_forward.1} parent=5 // pred_check
      %p528 = pneg %p527
    $region46: #{basic_block_forward.1} parent=5 // pred_check_branch
      %530 = sbr.rel (%p528) target = $region48
    $region47: #{basic_block_forward.1} parent=5 // pred_region
      %s531 = ssub.s32 %s11, 2
      // Predicated region
      $region49: #{basic_block_forward.1} parent=47 // pred_check
        %p532 = pneg %p150
      $region50: #{basic_block_forward.1} parent=47 // pred_check_branch
        %534 = sbr.rel (%p532) target = $region52
      $region51: #{basic_block_forward.1} parent=47 // pred_region
        %p535 = scmp.lt.s32.totalorder %s17, 1
        %s536 = scalar_select %p535, %s17, 1
        %s537 = smul.addr %s536, 2
        %s538 = smul.addr %s537, 8
        %s539 = scalar_lea.vmem %s5, %s538
      $region52: #{basic_block_forward.1} parent=47 // pred_fallthru
        _
    $region48: #{basic_block_forward.1} parent=5 // pred_fallthru
      _
  $region6: #{basic_block_forward.1} parent=0 // loop_footer
    %s15 = sadd.s32 1, %s11
  $region7: #{basic_block_forward.1} parent=0 // loop_footer_branch
    %10 = sbr.rel target = $region3
  $region8: #{basic_block_forward.1} parent=0 // loop_exit
    _

</llo_original>
